<compile_context>
chip_gen: v6e
topology: v6e:2x2x1
jax: 0.10.0
libtpu: 0.0.40
codegen_flags: <defaults>
</compile_context>

<pallas_src>
import functools

import jax
import jax.numpy as jnp
from jax.experimental import pallas as pl
from jax.experimental.pallas import tpu as pltpu

_LANE = 128      # vreg lane width
_SUBLANE = 8     # f32 sublane count


def _round_up(n, m):
    return ((n + m - 1) // m) * m


def _detect_num_tiles():
    """2 batch tiles when the device has 2 TensorCores (v7x), else 1 (v5e/v6e)."""
    try:
        return 2 if int(getattr(jax.devices()[0], "num_cores", 1)) >= 2 else 1
    except Exception:
        return 1


def _mlp_kernel(x_ref, w1_ref, b1_ref, w2_ref, b2_ref, w3_ref, b3_ref, o_ref):
    """One batch tile of the 3-layer MLP. All matmuls accumulate in f32 on the MXU."""
    x = x_ref[...]
    # Layer 1: Linear + ReLU   (TB, in_pad) @ (in_pad, Hp)
    h1 = jnp.dot(x, w1_ref[...], preferred_element_type=jnp.float32)
    h1 = jnp.maximum(h1 + b1_ref[...], 0.0)
    # Layer 2: Linear + ReLU   (TB, Hp) @ (Hp, Hp)
    h2 = jnp.dot(h1.astype(w2_ref.dtype), w2_ref[...], preferred_element_type=jnp.float32)
    h2 = jnp.maximum(h2 + b2_ref[...], 0.0)
    # Layer 3: Linear (no activation)   (TB, Hp) @ (Hp, O)
    out = jnp.dot(h2.astype(w3_ref.dtype), w3_ref[...], preferred_element_type=jnp.float32)
    o_ref[...] = (out + b3_ref[...]).astype(o_ref.dtype)


def prepare_params(w1, b1, w2, b2, w3, b3, *, param_dtype=jnp.float32):
    """One-time parameter prep (hoisted out of the per-call forward path).

    Pads in_features to a sublane multiple and hidden to 128 lanes; the output
    feature dim is left UNpadded (block minor dim == full array dim is legal and
    avoids inflating HBM writeback 64x).  Zero padding is mathematically exact:
    relu(0)=0 and padded weight rows/cols are zero.
    """
    in_features, hidden = w1.shape
    out_features = w3.shape[1]

    ip = _round_up(in_features, _SUBLANE)   # sublane-aligned contraction dim for layer 1
    hp = _round_up(hidden, _LANE)           # lane-dense hidden activations

    w1p = jnp.pad(w1, ((0, ip - in_features), (0, hp - hidden))).astype(param_dtype)
    b1p = jnp.pad(b1.reshape(1, -1), ((0, 0), (0, hp - hidden))).astype(jnp.float32)
    w2p = jnp.pad(w2, ((0, hp - hidden), (0, hp - hidden))).astype(param_dtype)
    b2p = jnp.pad(b2.reshape(1, -1), ((0, 0), (0, hp - hidden))).astype(jnp.float32)
    w3p = jnp.pad(w3, ((0, hp - hidden), (0, 0))).astype(param_dtype)
    b3p = b3.reshape(1, -1).astype(jnp.float32)
    return w1p, b1p, w2p, b2p, w3p, b3p


@functools.partial(jax.jit, static_argnames=("num_tiles",))
def _net_forward_impl(x, w1p, b1p, w2p, b2p, w3p, b3p, *, num_tiles):
    batch, in_features = x.shape
    in_pad = w1p.shape[0]
    hp = w1p.shape[1]
    out_features = w3p.shape[1]

    # Batch tile: one tile per TensorCore we want to feed; rounded up to sublanes.
    tb = _round_up(max(1, -(-batch // num_tiles)), _SUBLANE)
    bp = tb * num_tiles

    # Only the activations are padded/cast per call (params were prepared once).
    xp = jnp.pad(x, ((0, bp - batch), (0, in_pad - in_features))).astype(w1p.dtype)

    def _resident(shape):
        # Same block every grid step -> parameter stays VMEM-resident across tiles.
        return pl.BlockSpec(shape, lambda i: (0, 0))

    itemsize = jnp.dtype(w1p.dtype).itemsize
    flops = 2 * bp * (in_pad * hp + hp * hp + hp * out_features)
    bytes_accessed = (
        bp * in_pad * itemsize                                  # x
        + (in_pad * hp + hp * hp + hp * out_features) * itemsize  # weights
        + (2 * hp + out_features) * 4                           # biases (f32)
        + bp * out_features * 4                                 # output (f32)
    )

    out = pl.pallas_call(
        _mlp_kernel,
        out_shape=jax.ShapeDtypeStruct((bp, out_features), jnp.float32),
        grid=(num_tiles,),
        in_specs=[
            pl.BlockSpec((tb, in_pad), lambda i: (i, 0)),  # activations stream per tile
            _resident(w1p.shape), _resident(b1p.shape),
            _resident(w2p.shape), _resident(b2p.shape),
            _resident(w3p.shape), _resident(b3p.shape),
        ],
        out_specs=pl.BlockSpec((tb, out_features), lambda i: (i, 0)),
        compiler_params=pltpu.CompilerParams(
            # Batch tiles are independent -> shard across TensorCores on v7x.
            dimension_semantics=("parallel",),
        ),
        cost_estimate=pl.CostEstimate(
            flops=flops, transcendentals=0, bytes_accessed=bytes_accessed),
    )(xp, w1p, b1p, w2p, b2p, w3p, b3p)

    return out[:batch] if bp != batch else out


def net_forward(x, prepared_params, *, num_tiles=None):
    """Pallas forward for the DQN Net. `prepared_params` comes from prepare_params()."""
    if num_tiles is None:
        num_tiles = _detect_num_tiles()
    return _net_forward_impl(x, *prepared_params, num_tiles=num_tiles)


def init_params(key, input_size, hidden_size, output_size):
    """Deterministic init matching Net.__init__: weight ~ N(0, 0.1), bias = 0.
    Weights returned as (in, out) so the kernel computes x @ W + b."""
    k1, k2, k3 = jax.random.split(key, 3)
    w1 = 0.1 * jax.random.normal(k1, (input_size, hidden_size), jnp.float32)
    b1 = jnp.zeros((hidden_size,), jnp.float32)
    w2 = 0.1 * jax.random.normal(k2, (hidden_size, hidden_size), jnp.float32)
    b2 = jnp.zeros((hidden_size,), jnp.float32)
    w3 = 0.1 * jax.random.normal(k3, (hidden_size, output_size), jnp.float32)
    b3 = jnp.zeros((output_size,), jnp.float32)
    return w1, b1, w2, b2, w3, b3


if __name__ == "__main__":
    key = jax.random.PRNGKey(0)
    kx, kp = jax.random.split(key)

    # Small DQN-style workload: CartPole state dim 4 -> hidden 32 -> 2 actions.
    batch = 64
    input_size = 4
    hidden_size = 32
    output_size = 2

    x = jax.random.normal(kx, (batch, input_size), jnp.float32)
    params = init_params(kp, input_size, hidden_size, output_size)

    # One-time parameter prep (padding/casting hoisted out of the forward path).
    prepared = prepare_params(*params, param_dtype=jnp.float32)
    prepared = jax.tree_util.tree_map(jax.block_until_ready, prepared)

    out = net_forward(x, prepared)
    out = jax.block_until_ready(out)

    # Pure-JAX reference (same semantics as the PyTorch forward), unpadded params.
    w1, b1, w2, b2, w3, b3 = params
    h1 = jnp.maximum(x @ w1 + b1, 0.0)
    h2 = jnp.maximum(h1 @ w2 + b2, 0.0)
    ref = h2 @ w3 + b3

    assert out.shape == (batch, output_size), out.shape
    assert jnp.allclose(out, ref, atol=1e-4, rtol=1e-4), float(jnp.max(jnp.abs(out - ref)))

    print("KERNEL_OK")
</pallas_src>

<mosaic_0001>
module attributes {stable_mosaic.version = 11 : i64} {
  func.func @_mlp_kernel(%arg0: i32, %arg1: memref<64x8xf32, #tpu.memory_space<vmem>>, %arg2: memref<8x128xf32, #tpu.memory_space<vmem>>, %arg3: memref<1x128xf32, #tpu.memory_space<vmem>>, %arg4: memref<128x128xf32, #tpu.memory_space<vmem>>, %arg5: memref<1x128xf32, #tpu.memory_space<vmem>>, %arg6: memref<128x2xf32, #tpu.memory_space<vmem>>, %arg7: memref<1x2xf32, #tpu.memory_space<vmem>>, %arg8: memref<64x2xf32, #tpu.memory_space<vmem>>) attributes {dimension_semantics = [#tpu.dimension_semantics<parallel>], iteration_bounds = array<i64: 1>, scalar_prefetch = 0 : i64, scratch_operands = 0 : i64, tpu.core_type = #tpu.core_type<tc>, window_params = [{transform_indices = @transform_0, window_bounds = array<i64: 64, 8>}, {pipeline_mode = #tpu.pipeline_mode<synchronous>, transform_indices = @transform_1, window_bounds = array<i64: 8, 128>}, {pipeline_mode = #tpu.pipeline_mode<synchronous>, transform_indices = @transform_2, window_bounds = array<i64: 1, 128>}, {pipeline_mode = #tpu.pipeline_mode<synchronous>, transform_indices = @transform_3, window_bounds = array<i64: 128, 128>}, {pipeline_mode = #tpu.pipeline_mode<synchronous>, transform_indices = @transform_4, window_bounds = array<i64: 1, 128>}, {pipeline_mode = #tpu.pipeline_mode<synchronous>, transform_indices = @transform_5, window_bounds = array<i64: 128, 2>}, {pipeline_mode = #tpu.pipeline_mode<synchronous>, transform_indices = @transform_6, window_bounds = array<i64: 1, 2>}, {transform_indices = @transform_7, window_bounds = array<i64: 64, 2>}]} {
    %c0 = arith.constant 0 : index
    %c0_0 = arith.constant 0 : index
    %0 = vector.load %arg1[%c0, %c0_0] : memref<64x8xf32, #tpu.memory_space<vmem>>, vector<64x8xf32>
    %c0_1 = arith.constant 0 : index
    %c0_2 = arith.constant 0 : index
    %1 = vector.load %arg2[%c0_1, %c0_2] : memref<8x128xf32, #tpu.memory_space<vmem>>, vector<8x128xf32>
    %cst = arith.constant dense<0.000000e+00> : vector<64x128xf32>
    %2 = tpu.matmul %0, %1, %cst {dimension_numbers = #tpu.dot_dimension_numbers<[1], [0], [0], [1], [0, 0, 1, 1], [], []>} : vector<64x8xf32>, vector<8x128xf32>, vector<64x128xf32> -> vector<64x128xf32>
    %c0_3 = arith.constant 0 : index
    %c0_4 = arith.constant 0 : index
    %3 = vector.load %arg3[%c0_3, %c0_4] : memref<1x128xf32, #tpu.memory_space<vmem>>, vector<1x128xf32>
    %4 = vector.broadcast %3 : vector<1x128xf32> to vector<64x128xf32>
    %5 = arith.addf %2, %4 : vector<64x128xf32>
    %cst_5 = arith.constant 0.000000e+00 : f32
    %6 = vector.broadcast %cst_5 : f32 to vector<64x128xf32>
    %7 = arith.maximumf %5, %6 : vector<64x128xf32>
    %c0_6 = arith.constant 0 : index
    %c0_7 = arith.constant 0 : index
    %8 = vector.load %arg4[%c0_6, %c0_7] : memref<128x128xf32, #tpu.memory_space<vmem>>, vector<128x128xf32>
    %cst_8 = arith.constant dense<0.000000e+00> : vector<64x128xf32>
    %9 = tpu.matmul %7, %8, %cst_8 {dimension_numbers = #tpu.dot_dimension_numbers<[1], [0], [0], [1], [0, 0, 1, 1], [], []>} : vector<64x128xf32>, vector<128x128xf32>, vector<64x128xf32> -> vector<64x128xf32>
    %c0_9 = arith.constant 0 : index
    %c0_10 = arith.constant 0 : index
    %10 = vector.load %arg5[%c0_9, %c0_10] : memref<1x128xf32, #tpu.memory_space<vmem>>, vector<1x128xf32>
    %11 = vector.broadcast %10 : vector<1x128xf32> to vector<64x128xf32>
    %12 = arith.addf %9, %11 : vector<64x128xf32>
    %cst_11 = arith.constant 0.000000e+00 : f32
    %13 = vector.broadcast %cst_11 : f32 to vector<64x128xf32>
    %14 = arith.maximumf %12, %13 : vector<64x128xf32>
    %c0_12 = arith.constant 0 : index
    %c0_13 = arith.constant 0 : index
    %15 = vector.load %arg6[%c0_12, %c0_13] : memref<128x2xf32, #tpu.memory_space<vmem>>, vector<128x2xf32>
    %cst_14 = arith.constant dense<0.000000e+00> : vector<64x2xf32>
    %16 = tpu.matmul %14, %15, %cst_14 {dimension_numbers = #tpu.dot_dimension_numbers<[1], [0], [0], [1], [0, 0, 1, 1], [], []>} : vector<64x128xf32>, vector<128x2xf32>, vector<64x2xf32> -> vector<64x2xf32>
    %c0_15 = arith.constant 0 : index
    %c0_16 = arith.constant 0 : index
    %17 = vector.load %arg7[%c0_15, %c0_16] : memref<1x2xf32, #tpu.memory_space<vmem>>, vector<1x2xf32>
    %18 = vector.broadcast %17 : vector<1x2xf32> to vector<64x2xf32>
    %19 = arith.addf %16, %18 : vector<64x2xf32>
    %c0_17 = arith.constant 0 : index
    %c0_18 = arith.constant 0 : index
    %20 = vector.load %arg8[%c0_17, %c0_18] : memref<64x2xf32, #tpu.memory_space<vmem>>, vector<64x2xf32>
    tpu.vector_store %arg8[%c0_17, %c0_18], %19 {strides = array<i32>} : memref<64x2xf32, #tpu.memory_space<vmem>>, vector<64x2xf32>,
    return
  }
  func.func @transform_0(%arg0: i32) -> (i32, i32) {
    %c0_i32 = arith.constant 0 : i32
    %c0_i32_0 = arith.constant 0 : i32
    return %arg0, %c0_i32 : i32, i32
  }
  func.func @transform_1(%arg0: i32) -> (i32, i32) {
    %c0_i32 = arith.constant 0 : i32
    %c0_i32_0 = arith.constant 0 : i32
    %c0_i32_1 = arith.constant 0 : i32
    return %c0_i32, %c0_i32_0 : i32, i32
  }
  func.func @transform_2(%arg0: i32) -> (i32, i32) {
    %c0_i32 = arith.constant 0 : i32
    %c0_i32_0 = arith.constant 0 : i32
    %c0_i32_1 = arith.constant 0 : i32
    return %c0_i32, %c0_i32_0 : i32, i32
  }
  func.func @transform_3(%arg0: i32) -> (i32, i32) {
    %c0_i32 = arith.constant 0 : i32
    %c0_i32_0 = arith.constant 0 : i32
    %c0_i32_1 = arith.constant 0 : i32
    return %c0_i32, %c0_i32_0 : i32, i32
  }
  func.func @transform_4(%arg0: i32) -> (i32, i32) {
    %c0_i32 = arith.constant 0 : i32
    %c0_i32_0 = arith.constant 0 : i32
    %c0_i32_1 = arith.constant 0 : i32
    return %c0_i32, %c0_i32_0 : i32, i32
  }
  func.func @transform_5(%arg0: i32) -> (i32, i32) {
    %c0_i32 = arith.constant 0 : i32
    %c0_i32_0 = arith.constant 0 : i32
    %c0_i32_1 = arith.constant 0 : i32
    return %c0_i32, %c0_i32_0 : i32, i32
  }
  func.func @transform_6(%arg0: i32) -> (i32, i32) {
    %c0_i32 = arith.constant 0 : i32
    %c0_i32_0 = arith.constant 0 : i32
    %c0_i32_1 = arith.constant 0 : i32
    return %c0_i32, %c0_i32_0 : i32, i32
  }
  func.func @transform_7(%arg0: i32) -> (i32, i32) {
    %c0_i32 = arith.constant 0 : i32
    %c0_i32_0 = arith.constant 0 : i32
    return %arg0, %c0_i32 : i32, i32
  }
}

</mosaic_0001>

<llo_original>
// kernel: _net_forward_impl.1
$region0: #{_net_forward_impl.1}
  #allocation0 [shape = 'u32[]', space=smem, size = 0x4, offset = 0x4, fixed_abs, tag = 'smem constant byte address 0x4 - core index']
  #allocation1 [shape = 'u32[144,128]{1,0:T(1,128)}', space=vmem, size = 0x12000, scoped, tag = 'internal scratch']
  %s0 = inlined_call_operand.vmem [shape: f32[64,8], index: 0, kind: input, shape index: {}]
  %s1 = inlined_call_operand.vmem [shape: f32[8,128], index: 1, kind: input, shape index: {}]
  %s2 = inlined_call_operand.vmem [shape: f32[1,128], index: 2, kind: input, shape index: {}]
  %s3 = inlined_call_operand.vmem [shape: f32[128,128], index: 3, kind: input, shape index: {}]
  %s4 = inlined_call_operand.vmem [shape: f32[1,128], index: 4, kind: input, shape index: {}]
  %s5 = inlined_call_operand.vmem [shape: f32[128,2], index: 5, kind: input, shape index: {}]
  %s6 = inlined_call_operand.vmem [shape: f32[1,2], index: 6, kind: input, shape index: {}]
  %s7 = inlined_call_operand.vmem [shape: f32[64,2], index: 7, kind: output, shape index: {}]
  %s8 = sld [smem:[#allocation0]]
  $region38: #{_net_forward_impl.1} parent=0
    _
  %s10 = ssub.s32 1, %s8
  %s11 = scalar_select 0, %s10, %s8
  // Predicated region
  $region2: #{_net_forward_impl.1} parent=0 // pred_check
    _
  $region3: #{_net_forward_impl.1} parent=0 // pred_check_branch
    %13 = sbr.rel (0) target = $region5
  $region4: #{_net_forward_impl.1} parent=0 // pred_region
    _
  $region5: #{_net_forward_impl.1} parent=0 // pred_fallthru
    _
  // Predicated region
  $region6: #{_net_forward_impl.1} parent=0 // pred_check
    _
  $region7: #{_net_forward_impl.1} parent=0 // pred_check_branch
    %15 = sbr.rel (0) target = $region9
  $region8: #{_net_forward_impl.1} parent=0 // pred_region
    _
  $region9: #{_net_forward_impl.1} parent=0 // pred_fallthru
    _
  // Predicated region
  $region10: #{_net_forward_impl.1} parent=0 // pred_check
    _
  $region11: #{_net_forward_impl.1} parent=0 // pred_check_branch
    %17 = sbr.rel (0) target = $region13
  $region12: #{_net_forward_impl.1} parent=0 // pred_region
    _
  $region13: #{_net_forward_impl.1} parent=0 // pred_fallthru
    _
  // Predicated region
  $region14: #{_net_forward_impl.1} parent=0 // pred_check
    _
  $region15: #{_net_forward_impl.1} parent=0 // pred_check_branch
    %19 = sbr.rel (0) target = $region17
  $region16: #{_net_forward_impl.1} parent=0 // pred_region
    _
  $region17: #{_net_forward_impl.1} parent=0 // pred_fallthru
    _
  // Predicated region
  $region18: #{_net_forward_impl.1} parent=0 // pred_check
    _
  $region19: #{_net_forward_impl.1} parent=0 // pred_check_branch
    %21 = sbr.rel (0) target = $region21
  $region20: #{_net_forward_impl.1} parent=0 // pred_region
    _
  $region21: #{_net_forward_impl.1} parent=0 // pred_fallthru
    _
  // Predicated region
  $region22: #{_net_forward_impl.1} parent=0 // pred_check
    _
  $region23: #{_net_forward_impl.1} parent=0 // pred_check_branch
    %23 = sbr.rel (0) target = $region25
  $region24: #{_net_forward_impl.1} parent=0 // pred_region
    _
  $region25: #{_net_forward_impl.1} parent=0 // pred_fallthru
    _
  // Predicated region
  $region26: #{_net_forward_impl.1} parent=0 // pred_check
    _
  $region27: #{_net_forward_impl.1} parent=0 // pred_check_branch
    %25 = sbr.rel (0) target = $region29
  $region28: #{_net_forward_impl.1} parent=0 // pred_region
    _
  $region29: #{_net_forward_impl.1} parent=0 // pred_fallthru
    _
  %v26 = vld [vmem:[%s0] sm:$0xff]
  %v27 = vld [vmem:[%s0 + $0x8] sm:$0xff]
  %v28 = vld [vmem:[%s0 + $0x10] sm:$0xff]
  %v29 = vld [vmem:[%s0 + $0x18] sm:$0xff]
  %v30 = vld [vmem:[%s0 + $0x20] sm:$0xff]
  %v31 = vld [vmem:[%s0 + $0x28] sm:$0xff]
  %v32 = vld [vmem:[%s0 + $0x30] sm:$0xff]
  %v33 = vld [vmem:[%s0 + $0x38] sm:$0xff]
  %v34 = vld [vmem:[%s1] sm:$0xff]
  %v35 = vld [vmem:[%s2] sm:$0x1]
  %v37 = vlaneseq
  %v38 = vshrl.u32 %v37, 7
  %v39 = vsub.s32 0, %v38
  %v40 = vrot.slane %v35, %v39
  %vm42 = vcmask 64512
  %v44 = vsel %vm42, %v26, 0
  %v47 = vsel %vm42, %v27, 0
  %v50 = vsel %vm42, %v28, 0
  %v53 = vsel %vm42, %v29, 0
  %v56 = vsel %vm42, %v30, 0
  %v59 = vsel %vm42, %v31, 0
  %v62 = vsel %vm42, %v32, 0
  %v65 = vsel %vm42, %v33, 0
  %67 = vmatprep.subr.mxu0 0.0
  %68 = vmatpush1.msra.mxu0 0.0
  %69 = vmatprep.subr.mxu0 0.0
  %70 = vmatpush1.msra.mxu0 0.0
  %71 = vmatprep.subr.mxu0 0.0
  %72 = vmatpush1.msra.mxu0 0.0
  %73 = vmatprep.subr.mxu0 0.0
  %74 = vmatpush1.msra.mxu0 0.0
  %75 = vmatprep.subr.mxu0 0.0
  %76 = vmatpush1.msra.mxu0 0.0
  %77 = vmatprep.subr.mxu0 0.0
  %78 = vmatpush1.msra.mxu0 0.0
  %79 = vmatprep.subr.mxu0 0.0
  %80 = vmatpush1.msra.mxu0 0.0
  %81 = vmatprep.subr.mxu0 0.0
  %82 = vmatpush1.msra.mxu0 0.0
  %83 = vmatprep.subr.mxu0 0.0
  %84 = vmatpush1.msra.mxu0 0.0
  %85 = vmatprep.subr.mxu0 0.0
  %86 = vmatpush1.msra.mxu0 0.0
  %87 = vmatprep.subr.mxu0 0.0
  %88 = vmatpush1.msra.mxu0 0.0
  %89 = vmatprep.subr.mxu0 0.0
  %90 = vmatpush1.msra.mxu0 0.0
  %91 = vmatprep.subr.mxu0 0.0
  %92 = vmatpush1.msra.mxu0 0.0
  %93 = vmatprep.subr.mxu0 0.0
  %94 = vmatpush1.msra.mxu0 0.0
  %95 = vmatprep.subr.mxu0 0.0
  %96 = vmatpush1.msra.mxu0 0.0
  %97 = vmatprep.subr.mxu0 0.0
  %98 = vmatpush1.msra.mxu0 %v34
  %99 = vmatprep.subr.mxu0 0.0
  %100 = vmatpush2.msra.mxu0 0.0
  %101 = vmatprep.subr.mxu0 0.0
  %102 = vmatpush2.msra.mxu0 0.0
  %103 = vmatprep.subr.mxu0 0.0
  %104 = vmatpush2.msra.mxu0 0.0
  %105 = vmatprep.subr.mxu0 0.0
  %106 = vmatpush2.msra.mxu0 0.0
  %107 = vmatprep.subr.mxu0 0.0
  %108 = vmatpush2.msra.mxu0 0.0
  %109 = vmatprep.subr.mxu0 0.0
  %110 = vmatpush2.msra.mxu0 0.0
  %111 = vmatprep.subr.mxu0 0.0
  %112 = vmatpush2.msra.mxu0 0.0
  %113 = vmatprep.subr.mxu0 0.0
  %114 = vmatpush2.msra.mxu0 0.0
  %115 = vmatprep.subr.mxu0 0.0
  %116 = vmatpush2.msra.mxu0 0.0
  %117 = vmatprep.subr.mxu0 0.0
  %118 = vmatpush2.msra.mxu0 0.0
  %119 = vmatprep.subr.mxu0 0.0
  %120 = vmatpush2.msra.mxu0 0.0
  %121 = vmatprep.subr.mxu0 0.0
  %122 = vmatpush2.msra.mxu0 0.0
  %123 = vmatprep.subr.mxu0 0.0
  %124 = vmatpush2.msra.mxu0 0.0
  %125 = vmatprep.subr.mxu0 0.0
  %126 = vmatpush2.msra.mxu0 0.0
  %127 = vmatprep.subr.mxu0 0.0
  %128 = vmatpush2.msra.mxu0 0.0
  %129 = vmatprep.subr.mxu0 0.0
  %130 = vmatpush2.msra.mxu0 0.0
  %131 = vmatprep.mubr.f32.mxu0 0.0
  %132 = vmatmul.mubr.f32.gmra.mxu0 %v44
  %v133 = vpop.f32.mrf.mxu0
  %v134 = vadd.f32 %v40, %v133
  %v135 = vpop.f32.mrf.mxu0
  %136 = vmatprep.mubr.f32.mxu0 0.0
  %137 = vmatmul.mubr.f32.gmra.mxu0 %v47
  %v138 = vpop.f32.mrf.mxu0
  %v139 = vadd.f32 %v40, %v138
  %v140 = vpop.f32.mrf.mxu0
  %141 = vmatprep.mubr.f32.mxu0 0.0
  %142 = vmatmul.mubr.f32.gmra.mxu0 %v50
  %v143 = vpop.f32.mrf.mxu0
  %v144 = vadd.f32 %v40, %v143
  %v145 = vpop.f32.mrf.mxu0
  %146 = vmatprep.mubr.f32.mxu0 0.0
  %147 = vmatmul.mubr.f32.gmra.mxu0 %v53
  %v148 = vpop.f32.mrf.mxu0
  %v149 = vadd.f32 %v40, %v148
  %v150 = vpop.f32.mrf.mxu0
  %151 = vmatprep.mubr.f32.mxu0 0.0
  %152 = vmatmul.mubr.f32.gmra.mxu0 %v56
  %v153 = vpop.f32.mrf.mxu0
  %v154 = vadd.f32 %v40, %v153
  %v155 = vpop.f32.mrf.mxu0
  %156 = vmatprep.mubr.f32.mxu0 0.0
  %157 = vmatmul.mubr.f32.gmra.mxu0 %v59
  %v158 = vpop.f32.mrf.mxu0
  %v159 = vadd.f32 %v40, %v158
  %v160 = vpop.f32.mrf.mxu0
  %161 = vmatprep.mubr.f32.mxu0 0.0
  %162 = vmatmul.mubr.f32.gmra.mxu0 %v62
  %v163 = vpop.f32.mrf.mxu0
  %v164 = vadd.f32 %v40, %v163
  %v165 = vpop.f32.mrf.mxu0
  %166 = vmatprep.mubr.f32.mxu0 0.0
  %167 = vmatmul.mubr.f32.gmra.mxu0 %v65
  %v168 = vpop.f32.mrf.mxu0
  %v169 = vadd.f32 %v40, %v168
  %v170 = vpop.f32.mrf.mxu0
  %171 = vdwg.mxu0
  %v172 = vmax.f32 %v134, 0.0
  %v173 = vmax.f32 %v139, 0.0
  %v174 = vmax.f32 %v144, 0.0
  %v175 = vmax.f32 %v149, 0.0
  %v176 = vmax.f32 %v154, 0.0
  %v177 = vmax.f32 %v159, 0.0
  %v178 = vmax.f32 %v164, 0.0
  %v179 = vmax.f32 %v169, 0.0
  %v180 = vld [vmem:[%s3] sm:$0xff]
  %v181 = vld [vmem:[%s3 + $0x8] sm:$0xff]
  %v182 = vld [vmem:[%s3 + $0x10] sm:$0xff]
  %v183 = vld [vmem:[%s3 + $0x18] sm:$0xff]
  %v184 = vld [vmem:[%s3 + $0x20] sm:$0xff]
  %v185 = vld [vmem:[%s3 + $0x28] sm:$0xff]
  %v186 = vld [vmem:[%s3 + $0x30] sm:$0xff]
  %v187 = vld [vmem:[%s3 + $0x38] sm:$0xff]
  %v188 = vld [vmem:[%s3 + $0x40] sm:$0xff]
  %v189 = vld [vmem:[%s3 + $0x48] sm:$0xff]
  %v190 = vld [vmem:[%s3 + $0x50] sm:$0xff]
  %v191 = vld [vmem:[%s3 + $0x58] sm:$0xff]
  %v192 = vld [vmem:[%s3 + $0x60] sm:$0xff]
  %v193 = vld [vmem:[%s3 + $0x68] sm:$0xff]
  %v194 = vld [vmem:[%s3 + $0x70] sm:$0xff]
  %v195 = vld [vmem:[%s3 + $0x78] sm:$0xff]
  %v196 = vld [vmem:[%s4] sm:$0x1]
  %v198 = vlaneseq
  %v199 = vshrl.u32 %v198, 7
  %v200 = vsub.s32 0, %v199
  %v201 = vrot.slane %v196, %v200
  %203 = vmatprep.subr.mxu0 0.0
  %204 = vmatpush1.msra.mxu0 %v195
  %205 = vmatprep.subr.mxu0 0.0
  %206 = vmatpush1.msra.mxu0 %v194
  %207 = vmatprep.subr.mxu0 0.0
  %208 = vmatpush1.msra.mxu0 %v193
  %209 = vmatprep.subr.mxu0 0.0
  %210 = vmatpush1.msra.mxu0 %v192
  %211 = vmatprep.subr.mxu0 0.0
  %212 = vmatpush1.msra.mxu0 %v191
  %213 = vmatprep.subr.mxu0 0.0
  %214 = vmatpush1.msra.mxu0 %v190
  %215 = vmatprep.subr.mxu0 0.0
  %216 = vmatpush1.msra.mxu0 %v189
  %217 = vmatprep.subr.mxu0 0.0
  %218 = vmatpush1.msra.mxu0 %v188
  %219 = vmatprep.subr.mxu0 0.0
  %220 = vmatpush1.msra.mxu0 %v187
  %221 = vmatprep.subr.mxu0 0.0
  %222 = vmatpush1.msra.mxu0 %v186
  %223 = vmatprep.subr.mxu0 0.0
  %224 = vmatpush1.msra.mxu0 %v185
  %225 = vmatprep.subr.mxu0 0.0
  %226 = vmatpush1.msra.mxu0 %v184
  %227 = vmatprep.subr.mxu0 0.0
  %228 = vmatpush1.msra.mxu0 %v183
  %229 = vmatprep.subr.mxu0 0.0
  %230 = vmatpush1.msra.mxu0 %v182
  %231 = vmatprep.subr.mxu0 0.0
  %232 = vmatpush1.msra.mxu0 %v181
  %233 = vmatprep.subr.mxu0 0.0
  %234 = vmatpush1.msra.mxu0 %v180
  %235 = vmatprep.subr.mxu0 0.0
  %236 = vmatpush2.msra.mxu0 0.0
  %237 = vmatprep.subr.mxu0 0.0
  %238 = vmatpush2.msra.mxu0 0.0
  %239 = vmatprep.subr.mxu0 0.0
  %240 = vmatpush2.msra.mxu0 0.0
  %241 = vmatprep.subr.mxu0 0.0
  %242 = vmatpush2.msra.mxu0 0.0
  %243 = vmatprep.subr.mxu0 0.0
  %244 = vmatpush2.msra.mxu0 0.0
  %245 = vmatprep.subr.mxu0 0.0
  %246 = vmatpush2.msra.mxu0 0.0
  %247 = vmatprep.subr.mxu0 0.0
  %248 = vmatpush2.msra.mxu0 0.0
  %249 = vmatprep.subr.mxu0 0.0
  %250 = vmatpush2.msra.mxu0 0.0
  %251 = vmatprep.subr.mxu0 0.0
  %252 = vmatpush2.msra.mxu0 0.0
  %253 = vmatprep.subr.mxu0 0.0
  %254 = vmatpush2.msra.mxu0 0.0
  %255 = vmatprep.subr.mxu0 0.0
  %256 = vmatpush2.msra.mxu0 0.0
  %257 = vmatprep.subr.mxu0 0.0
  %258 = vmatpush2.msra.mxu0 0.0
  %259 = vmatprep.subr.mxu0 0.0
  %260 = vmatpush2.msra.mxu0 0.0
  %261 = vmatprep.subr.mxu0 0.0
  %262 = vmatpush2.msra.mxu0 0.0
  %263 = vmatprep.subr.mxu0 0.0
  %264 = vmatpush2.msra.mxu0 0.0
  %265 = vmatprep.subr.mxu0 0.0
  %266 = vmatpush2.msra.mxu0 0.0
  %267 = vmatprep.mubr.f32.mxu0 0.0
  %268 = vmatmul.mubr.f32.gmra.mxu0 %v172
  %v269 = vpop.f32.mrf.mxu0
  %v270 = vadd.f32 %v201, %v269
  %v271 = vpop.f32.mrf.mxu0
  %272 = vmatprep.mubr.f32.mxu0 0.0
  %273 = vmatmul.mubr.f32.gmra.mxu0 %v173
  %v274 = vpop.f32.mrf.mxu0
  %v275 = vadd.f32 %v201, %v274
  %v276 = vpop.f32.mrf.mxu0
  %277 = vmatprep.mubr.f32.mxu0 0.0
  %278 = vmatmul.mubr.f32.gmra.mxu0 %v174
  %v279 = vpop.f32.mrf.mxu0
  %v280 = vadd.f32 %v201, %v279
  %v281 = vpop.f32.mrf.mxu0
  %282 = vmatprep.mubr.f32.mxu0 0.0
  %283 = vmatmul.mubr.f32.gmra.mxu0 %v175
  %v284 = vpop.f32.mrf.mxu0
  %v285 = vadd.f32 %v201, %v284
  %v286 = vpop.f32.mrf.mxu0
  %287 = vmatprep.mubr.f32.mxu0 0.0
  %288 = vmatmul.mubr.f32.gmra.mxu0 %v176
  %v289 = vpop.f32.mrf.mxu0
  %v290 = vadd.f32 %v201, %v289
  %v291 = vpop.f32.mrf.mxu0
  %292 = vmatprep.mubr.f32.mxu0 0.0
  %293 = vmatmul.mubr.f32.gmra.mxu0 %v177
  %v294 = vpop.f32.mrf.mxu0
  %v295 = vadd.f32 %v201, %v294
  %v296 = vpop.f32.mrf.mxu0
  %297 = vmatprep.mubr.f32.mxu0 0.0
  %298 = vmatmul.mubr.f32.gmra.mxu0 %v178
  %v299 = vpop.f32.mrf.mxu0
  %v300 = vadd.f32 %v201, %v299
  %v301 = vpop.f32.mrf.mxu0
  %302 = vmatprep.mubr.f32.mxu0 0.0
  %303 = vmatmul.mubr.f32.gmra.mxu0 %v179
  %v304 = vpop.f32.mrf.mxu0
  %v305 = vadd.f32 %v201, %v304
  %v306 = vpop.f32.mrf.mxu0
  %307 = vdwg.mxu0
  %v308 = vmax.f32 %v270, 0.0
  %v309 = vmax.f32 %v275, 0.0
  %v310 = vmax.f32 %v280, 0.0
  %v311 = vmax.f32 %v285, 0.0
  %v312 = vmax.f32 %v290, 0.0
  %v313 = vmax.f32 %v295, 0.0
  %v314 = vmax.f32 %v300, 0.0
  %v315 = vmax.f32 %v305, 0.0
  %v316 = vld [vmem:[%s5] sm:$0xff]
  %v317 = vld [vmem:[%s5 + $0x8] sm:$0xff]
  %v318 = vld [vmem:[%s5 + $0x10] sm:$0xff]
  %v319 = vld [vmem:[%s5 + $0x18] sm:$0xff]
  %v320 = vld [vmem:[%s5 + $0x20] sm:$0xff]
  %v321 = vld [vmem:[%s5 + $0x28] sm:$0xff]
  %v322 = vld [vmem:[%s5 + $0x30] sm:$0xff]
  %v323 = vld [vmem:[%s5 + $0x38] sm:$0xff]
  %v324 = vld [vmem:[%s5 + $0x40] sm:$0xff]
  %v325 = vld [vmem:[%s5 + $0x48] sm:$0xff]
  %v326 = vld [vmem:[%s5 + $0x50] sm:$0xff]
  %v327 = vld [vmem:[%s5 + $0x58] sm:$0xff]
  %v328 = vld [vmem:[%s5 + $0x60] sm:$0xff]
  %v329 = vld [vmem:[%s5 + $0x68] sm:$0xff]
  %v330 = vld [vmem:[%s5 + $0x70] sm:$0xff]
  %v331 = vld [vmem:[%s5 + $0x78] sm:$0xff]
  %v332 = vld [vmem:[%s6] sm:$0x1]
  %v334 = vlaneseq
  %v335 = vshrl.u32 %v334, 7
  %v336 = vsub.s32 0, %v335
  %v337 = vrot.slane %v332, %v336
  %339 = vmatprep.subr.mxu0 0.0
  %340 = vmatpush1.msra.mxu0 %v331
  %341 = vmatprep.subr.mxu0 0.0
  %342 = vmatpush1.msra.mxu0 %v330
  %343 = vmatprep.subr.mxu0 0.0
  %344 = vmatpush1.msra.mxu0 %v329
  %345 = vmatprep.subr.mxu0 0.0
  %346 = vmatpush1.msra.mxu0 %v328
  %347 = vmatprep.subr.mxu0 0.0
  %348 = vmatpush1.msra.mxu0 %v327
  %349 = vmatprep.subr.mxu0 0.0
  %350 = vmatpush1.msra.mxu0 %v326
  %351 = vmatprep.subr.mxu0 0.0
  %352 = vmatpush1.msra.mxu0 %v325
  %353 = vmatprep.subr.mxu0 0.0
  %354 = vmatpush1.msra.mxu0 %v324
  %355 = vmatprep.subr.mxu0 0.0
  %356 = vmatpush1.msra.mxu0 %v323
  %357 = vmatprep.subr.mxu0 0.0
  %358 = vmatpush1.msra.mxu0 %v322
  %359 = vmatprep.subr.mxu0 0.0
  %360 = vmatpush1.msra.mxu0 %v321
  %361 = vmatprep.subr.mxu0 0.0
  %362 = vmatpush1.msra.mxu0 %v320
  %363 = vmatprep.subr.mxu0 0.0
  %364 = vmatpush1.msra.mxu0 %v319
  %365 = vmatprep.subr.mxu0 0.0
  %366 = vmatpush1.msra.mxu0 %v318
  %367 = vmatprep.subr.mxu0 0.0
  %368 = vmatpush1.msra.mxu0 %v317
  %369 = vmatprep.subr.mxu0 0.0
  %370 = vmatpush1.msra.mxu0 %v316
  %371 = vmatprep.subr.mxu0 0.0
  %372 = vmatpush2.msra.mxu0 0.0
  %373 = vmatprep.subr.mxu0 0.0
  %374 = vmatpush2.msra.mxu0 0.0
  %375 = vmatprep.subr.mxu0 0.0
  %376 = vmatpush2.msra.mxu0 0.0
  %377 = vmatprep.subr.mxu0 0.0
  %378 = vmatpush2.msra.mxu0 0.0
  %379 = vmatprep.subr.mxu0 0.0
  %380 = vmatpush2.msra.mxu0 0.0
  %381 = vmatprep.subr.mxu0 0.0
  %382 = vmatpush2.msra.mxu0 0.0
  %383 = vmatprep.subr.mxu0 0.0
  %384 = vmatpush2.msra.mxu0 0.0
  %385 = vmatprep.subr.mxu0 0.0
  %386 = vmatpush2.msra.mxu0 0.0
  %387 = vmatprep.subr.mxu0 0.0
  %388 = vmatpush2.msra.mxu0 0.0
  %389 = vmatprep.subr.mxu0 0.0
  %390 = vmatpush2.msra.mxu0 0.0
  %391 = vmatprep.subr.mxu0 0.0
  %392 = vmatpush2.msra.mxu0 0.0
  %393 = vmatprep.subr.mxu0 0.0
  %394 = vmatpush2.msra.mxu0 0.0
  %395 = vmatprep.subr.mxu0 0.0
  %396 = vmatpush2.msra.mxu0 0.0
  %397 = vmatprep.subr.mxu0 0.0
  %398 = vmatpush2.msra.mxu0 0.0
  %399 = vmatprep.subr.mxu0 0.0
  %400 = vmatpush2.msra.mxu0 0.0
  %401 = vmatprep.subr.mxu0 0.0
  %402 = vmatpush2.msra.mxu0 0.0
  %403 = vmatprep.mubr.f32.mxu0 0.0
  %404 = vmatmul.mubr.f32.gmra.mxu0 %v308
  %v405 = vpop.f32.mrf.mxu0
  %v406 = vadd.f32 %v337, %v405
  %v407 = vpop.f32.mrf.mxu0
  %408 = vmatprep.mubr.f32.mxu0 0.0
  %409 = vmatmul.mubr.f32.gmra.mxu0 %v309
  %v410 = vpop.f32.mrf.mxu0
  %v411 = vadd.f32 %v337, %v410
  %v412 = vpop.f32.mrf.mxu0
  %413 = vmatprep.mubr.f32.mxu0 0.0
  %414 = vmatmul.mubr.f32.gmra.mxu0 %v310
  %v415 = vpop.f32.mrf.mxu0
  %v416 = vadd.f32 %v337, %v415
  %v417 = vpop.f32.mrf.mxu0
  %418 = vmatprep.mubr.f32.mxu0 0.0
  %419 = vmatmul.mubr.f32.gmra.mxu0 %v311
  %v420 = vpop.f32.mrf.mxu0
  %v421 = vadd.f32 %v337, %v420
  %v422 = vpop.f32.mrf.mxu0
  %423 = vmatprep.mubr.f32.mxu0 0.0
  %424 = vmatmul.mubr.f32.gmra.mxu0 %v312
  %v425 = vpop.f32.mrf.mxu0
  %v426 = vadd.f32 %v337, %v425
  %v427 = vpop.f32.mrf.mxu0
  %428 = vmatprep.mubr.f32.mxu0 0.0
  %429 = vmatmul.mubr.f32.gmra.mxu0 %v313
  %v430 = vpop.f32.mrf.mxu0
  %v431 = vadd.f32 %v337, %v430
  %v432 = vpop.f32.mrf.mxu0
  %433 = vmatprep.mubr.f32.mxu0 0.0
  %434 = vmatmul.mubr.f32.gmra.mxu0 %v314
  %v435 = vpop.f32.mrf.mxu0
  %v436 = vadd.f32 %v337, %v435
  %v437 = vpop.f32.mrf.mxu0
  %438 = vmatprep.mubr.f32.mxu0 0.0
  %439 = vmatmul.mubr.f32.gmra.mxu0 %v315
  %v440 = vpop.f32.mrf.mxu0
  %v441 = vadd.f32 %v337, %v440
  %v442 = vpop.f32.mrf.mxu0
  %443 = vdwg.mxu0
  %vm444 = vcmask 15360
  %445 = vst.msk [vmem:[%s7] sm:$0xff] %vm444, %v406
  %446 = vst.msk [vmem:[%s7 + $0x8] sm:$0xff] %vm444, %v411
  %447 = vst.msk [vmem:[%s7 + $0x10] sm:$0xff] %vm444, %v416
  %448 = vst.msk [vmem:[%s7 + $0x18] sm:$0xff] %vm444, %v421
  %449 = vst.msk [vmem:[%s7 + $0x20] sm:$0xff] %vm444, %v426
  %450 = vst.msk [vmem:[%s7 + $0x28] sm:$0xff] %vm444, %v431
  %451 = vst.msk [vmem:[%s7 + $0x30] sm:$0xff] %vm444, %v436
  %452 = vst.msk [vmem:[%s7 + $0x38] sm:$0xff] %vm444, %v441
  // Predicated region
  $region30: #{_net_forward_impl.1} parent=0 // pred_check
    _
  $region31: #{_net_forward_impl.1} parent=0 // pred_check_branch
    %454 = sbr.rel (0) target = $region33
  $region32: #{_net_forward_impl.1} parent=0 // pred_region
    _
  $region33: #{_net_forward_impl.1} parent=0 // pred_fallthru
    _
  // Predicated region
  $region34: #{_net_forward_impl.1} parent=0 // pred_check
    _
  $region35: #{_net_forward_impl.1} parent=0 // pred_check_branch
    %456 = sbr.rel (0) target = $region37
  $region36: #{_net_forward_impl.1} parent=0 // pred_region
    _
  $region37: #{_net_forward_impl.1} parent=0 // pred_fallthru
    _

</llo_original>
